<compile_context>
chip_gen: v5e
topology: v5e:2x2
jax: 0.10.0
libtpu: 0.0.40
codegen_flags: <defaults>
</compile_context>

<pallas_src>
import functools

import jax
import jax.numpy as jnp
from jax.experimental import pallas as pl
from jax.experimental.pallas import tpu as pltpu

_COLS = 512            # lane dim: 4 * 128 -> unmasked, dense vector stores
_MAX_BLOCK_ROWS = 512  # 512 x 512 f32 block = 1 MiB per array per buffer
_MANTISSA_BITS = 23    # uniform granularity 2^-23 (exactly representable in f32)

_COMPILER_PARAMS = pltpu.CompilerParams(dimension_semantics=("parallel",))


def _sg_eval_kernel(x1_ref, x2_ref, o_ref, *, alpha):
    x1 = x1_ref[...].astype(jnp.float32)
    x2 = x2_ref[...].astype(jnp.float32)
    o_ref[...] = ((1.0 - alpha) * x1 + alpha * x2).astype(o_ref.dtype)


def _sg_train_kernel(x1_ref, x2_ref, bits_ref, o_ref, *, alpha, inv_keep, threshold):
    x1 = x1_ref[...].astype(jnp.float32)
    x2 = x2_ref[...].astype(jnp.float32)
    # P(keep) = 1 - alpha: keep iff low-23-bit uniform >= alpha * 2^23.
    u = bits_ref[...] & jnp.uint32((1 << _MANTISSA_BITS) - 1)
    keep = u >= jnp.uint32(threshold)
    x1n = (x1 - alpha * x2) * inv_keep
    o_ref[...] = jnp.where(keep, x1n, x2).astype(o_ref.dtype)


def stochastic_gate(x1, x2, alpha_rate=0.3, training=False, seed=0):
    """Forward pass of Wseg's StochasticGate for NCHW (or any-shape) tensors."""
    assert x1.shape == x2.shape, "Shapes must match"
    assert x1.ndim < 2 or x1.shape[1] == x2.shape[1], "Number of features is different"
    orig_shape = x1.shape
    out_dtype = x1.dtype
    alpha = float(alpha_rate)

    # Flatten to a lane-dense 2-D slab; rows are kept a multiple of 8 (sublane).
    n = x1.size
    chunk = 8 * _COLS
    pad = (-n) % chunk
    x1f = x1.reshape(-1)
    x2f = x2.reshape(-1)
    if pad:  # only copies when alignment actually requires it
        x1f = jnp.pad(x1f, (0, pad))
        x2f = jnp.pad(x2f, (0, pad))
    rows = (n + pad) // _COLS
    x1f = x1f.reshape(rows, _COLS)
    x2f = x2f.reshape(rows, _COLS)

    block_rows = min(_MAX_BLOCK_ROWS, rows)
    grid = (pl.cdiv(rows, block_rows),)
    block = pl.BlockSpec((block_rows, _COLS), lambda i: (i, 0))
    out_shape = jax.ShapeDtypeStruct((rows, _COLS), out_dtype)

    if training:
        bits = jax.random.bits(jax.random.PRNGKey(seed), (rows, _COLS), dtype=jnp.uint32)
        threshold = min(int(round(alpha * (1 << _MANTISSA_BITS))), (1 << _MANTISSA_BITS) - 1)
        inv_keep = 1.0 / max(1e-8, 1.0 - alpha)
        kernel = functools.partial(
            _sg_train_kernel, alpha=alpha, inv_keep=inv_keep, threshold=threshold
        )
        out = pl.pallas_call(
            kernel,
            out_shape=out_shape,
            grid=grid,
            in_specs=[block, block, block],
            out_specs=block,
            compiler_params=_COMPILER_PARAMS,
        )(x1f, x2f, bits)
    else:
        kernel = functools.partial(_sg_eval_kernel, alpha=alpha)
        out = pl.pallas_call(
            kernel,
            out_shape=out_shape,
            grid=grid,
            in_specs=[block, block],
            out_specs=block,
            compiler_params=_COMPILER_PARAMS,
        )(x1f, x2f)

    out = out.reshape(-1)
    if pad:
        out = out[:n]
    return out.reshape(orig_shape)


if __name__ == "__main__":
    key = jax.random.PRNGKey(0)
    k1, k2 = jax.random.split(key)
    B, C, H, W = 2, 4, 16, 16
    x1 = jax.random.normal(k1, (B, C, H, W), dtype=jnp.float32)
    x2 = jax.random.normal(k2, (B, C, H, W), dtype=jnp.float32)
    alpha = 0.3

    # Eval (deterministic) path — check against pure-JAX reference.
    y_eval = jax.block_until_ready(
        stochastic_gate(x1, x2, alpha_rate=alpha, training=False)
    )
    y_ref = (1.0 - alpha) * x1 + alpha * x2
    assert y_eval.shape == (B, C, H, W)
    assert y_eval.dtype == x1.dtype
    assert jnp.allclose(y_eval, y_ref, atol=1e-6, rtol=1e-6)

    # Training (stochastic) path — every element must equal one of the two
    # gate branches, and the keep fraction must be roughly 1 - alpha.
    y_train = jax.block_until_ready(
        stochastic_gate(x1, x2, alpha_rate=alpha, training=True, seed=1234)
    )
    x1n = (x1 - alpha * x2) / (1.0 - alpha)
    took_x1 = jnp.isclose(y_train, x1n, atol=1e-5)
    took_x2 = jnp.isclose(y_train, x2, atol=1e-5)
    assert y_train.shape == (B, C, H, W)
    assert bool(jnp.all(took_x1 | took_x2))
    keep_frac = float(jnp.mean(took_x1))
    assert 0.55 < keep_frac < 0.85, keep_frac  # expected ~0.7 over 2048 samples

    print("KERNEL_OK")
</pallas_src>

<mosaic_0001>
module attributes {stable_mosaic.version = 11 : i64} {
  func.func @_sg_eval_kernel(%arg0: i32, %arg1: memref<8x512xf32, #tpu.memory_space<vmem>>, %arg2: memref<8x512xf32, #tpu.memory_space<vmem>>, %arg3: memref<8x512xf32, #tpu.memory_space<vmem>>) attributes {dimension_semantics = [#tpu.dimension_semantics<parallel>], iteration_bounds = array<i64: 1>, scalar_prefetch = 0 : i64, scratch_operands = 0 : i64, tpu.core_type = #tpu.core_type<tc>, window_params = [{transform_indices = @transform_0, window_bounds = array<i64: 8, 512>}, {transform_indices = @transform_1, window_bounds = array<i64: 8, 512>}, {transform_indices = @transform_2, window_bounds = array<i64: 8, 512>}]} {
    %c0 = arith.constant 0 : index
    %c0_0 = arith.constant 0 : index
    %0 = vector.load %arg1[%c0, %c0_0] : memref<8x512xf32, #tpu.memory_space<vmem>>, vector<8x512xf32>
    %c0_1 = arith.constant 0 : index
    %c0_2 = arith.constant 0 : index
    %1 = vector.load %arg2[%c0_1, %c0_2] : memref<8x512xf32, #tpu.memory_space<vmem>>, vector<8x512xf32>
    %cst = arith.constant 0.699999988 : f32
    %2 = vector.broadcast %cst : f32 to vector<8x512xf32>
    %3 = arith.mulf %2, %0 : vector<8x512xf32>
    %cst_3 = arith.constant 3.000000e-01 : f32
    %4 = vector.broadcast %cst_3 : f32 to vector<8x512xf32>
    %5 = arith.mulf %4, %1 : vector<8x512xf32>
    %6 = arith.addf %3, %5 : vector<8x512xf32>
    %c0_4 = arith.constant 0 : index
    %c0_5 = arith.constant 0 : index
    %7 = vector.load %arg3[%c0_4, %c0_5] : memref<8x512xf32, #tpu.memory_space<vmem>>, vector<8x512xf32>
    tpu.vector_store %arg3[%c0_4, %c0_5], %6 {strides = array<i32>} : memref<8x512xf32, #tpu.memory_space<vmem>>, vector<8x512xf32>,
    return
  }
  func.func @transform_0(%arg0: i32) -> (i32, i32) {
    %c0_i32 = arith.constant 0 : i32
    %c0_i32_0 = arith.constant 0 : i32
    return %arg0, %c0_i32 : i32, i32
  }
  func.func @transform_1(%arg0: i32) -> (i32, i32) {
    %c0_i32 = arith.constant 0 : i32
    %c0_i32_0 = arith.constant 0 : i32
    return %arg0, %c0_i32 : i32, i32
  }
  func.func @transform_2(%arg0: i32) -> (i32, i32) {
    %c0_i32 = arith.constant 0 : i32
    %c0_i32_0 = arith.constant 0 : i32
    return %arg0, %c0_i32 : i32, i32
  }
}

</mosaic_0001>

<llo_original>
// kernel: tpu_custom_call.1
$region0: #{tpu_custom_call.1}
  #allocation0 [shape = 'u32[]', space=smem, size = 0x4, offset = 0x4, fixed_abs, tag = 'smem constant byte address 0x4 - core index']
  #allocation1 [shape = 'u32[72,128]{1,0:T(1,128)}', space=vmem, size = 0x9000, scoped, tag = 'internal scratch']
  %s0 = inlined_call_operand.hbm [shape: f32[8,512], index: 0, kind: input, shape index: {}]
  %s1 = inlined_call_operand.hbm [shape: f32[8,512], index: 1, kind: input, shape index: {}]
  %s2 = inlined_call_operand.hbm [shape: f32[8,512], index: 2, kind: output, shape index: {}]
  %s3 = sld [smem:[#allocation0]]
  $region26: #{tpu_custom_call.1} parent=0
    _
  %s5 = ssub.s32 1, %s3
  %s6 = scalar_select 0, %s5, %s3
  $region1: #{tpu_custom_call.1} parent=0
    #allocation2 [shape = 'u8[16384]{0}', space=vmem, size = 0x4000, scoped, tag = 'input window, operand 0, single buffered']
    #allocation3 [shape = 's32[1]{0}', space=sflag, size = 0x4, scoped, tag = 'scoped memory for tpu_custom_call.1']
    #allocation4 [shape = 's32[1]{0}', space=sflag, size = 0x4, scoped, tag = 'scoped memory for tpu_custom_call.1']
    #allocation5 [shape = 'u8[16384]{0}', space=vmem, size = 0x4000, scoped, tag = 'input window, operand 1, single buffered']
    #allocation6 [shape = 's32[1]{0}', space=sflag, size = 0x4, scoped, tag = 'scoped memory for tpu_custom_call.1']
    #allocation7 [shape = 'u8[16384]{0}', space=vmem, size = 0x4000, scoped, tag = 'output window, operand 0, single buffered']
    %7 = vsyncpa [#allocation3], 0
    %8 = vsyncpa [#allocation6], 0
    %9 = vsyncpa [#allocation4], 0
    // Predicated region
    $region2: #{tpu_custom_call.1} parent=1 // pred_check
      _
    $region3: #{tpu_custom_call.1} parent=1 // pred_check_branch
      %11 = sbr.rel (0) target = $region5
    $region4: #{tpu_custom_call.1} parent=1 // pred_region
      %13 = vsyncadd [#allocation3], 0
      %s15 = sshll.u32 %s0, 4
      %s16 = int_to_ptr.hbm [resolvable:$true] %s15
      %s17 = sshll.u32 [#allocation2], 4
      %s18 = int_to_ptr.vmem [resolvable:$true] %s17
      %20 = dma.hbm_to_vmem [thread:$0]  %s16, 512, %s18, [#allocation3]
    $region5: #{tpu_custom_call.1} parent=1 // pred_fallthru
      _
    // Predicated region
    $region6: #{tpu_custom_call.1} parent=1 // pred_check
      _
    $region7: #{tpu_custom_call.1} parent=1 // pred_check_branch
      %22 = sbr.rel (0) target = $region9
    $region8: #{tpu_custom_call.1} parent=1 // pred_region
      %24 = vsyncadd [#allocation6], 0
      %s26 = sshll.u32 %s1, 4
      %s27 = int_to_ptr.hbm [resolvable:$true] %s26
      %s28 = sshll.u32 [#allocation5], 4
      %s29 = int_to_ptr.vmem [resolvable:$true] %s28
      %31 = dma.hbm_to_vmem [thread:$0]  %s27, 512, %s29, [#allocation6]
    $region9: #{tpu_custom_call.1} parent=1 // pred_fallthru
      _
    // Predicated region
    $region10: #{tpu_custom_call.1} parent=1 // pred_check
      _
    $region11: #{tpu_custom_call.1} parent=1 // pred_check_branch
      %33 = sbr.rel (0) target = $region13
    $region12: #{tpu_custom_call.1} parent=1 // pred_region
      %35 = dma.done [#allocation3], 512
    $region13: #{tpu_custom_call.1} parent=1 // pred_fallthru
      _
    // Predicated region
    $region14: #{tpu_custom_call.1} parent=1 // pred_check
      _
    $region15: #{tpu_custom_call.1} parent=1 // pred_check_branch
      %37 = sbr.rel (0) target = $region17
    $region16: #{tpu_custom_call.1} parent=1 // pred_region
      %39 = dma.done [#allocation6], 512
    $region17: #{tpu_custom_call.1} parent=1 // pred_fallthru
      _
    %v40 = vld [vmem:[#allocation2] sm:$0xff]
    %v41 = vld [vmem:[#allocation2 + $0x8] sm:$0xff]
    %v42 = vld [vmem:[#allocation2 + $0x10] sm:$0xff]
    %v43 = vld [vmem:[#allocation2 + $0x18] sm:$0xff]
    %v44 = vld [vmem:[#allocation5] sm:$0xff]
    %v45 = vld [vmem:[#allocation5 + $0x8] sm:$0xff]
    %v46 = vld [vmem:[#allocation5 + $0x10] sm:$0xff]
    %v47 = vld [vmem:[#allocation5 + $0x18] sm:$0xff]
    %v48 = vmul.f32 %v40, 0.7
    %v49 = vmul.f32 %v41, 0.7
    %v50 = vmul.f32 %v42, 0.7
    %v51 = vmul.f32 %v43, 0.7
    %v52 = vmul.f32 %v44, 0.3
    %v53 = vmul.f32 %v45, 0.3
    %v54 = vmul.f32 %v46, 0.3
    %v55 = vmul.f32 %v47, 0.3
    %v56 = vadd.f32 %v48, %v52
    %v57 = vadd.f32 %v49, %v53
    %v58 = vadd.f32 %v50, %v54
    %v59 = vadd.f32 %v51, %v55
    %60 = vst [vmem:[#allocation7] sm:$0xff] %v56
    %61 = vst [vmem:[#allocation7 + $0x8] sm:$0xff] %v57
    %62 = vst [vmem:[#allocation7 + $0x10] sm:$0xff] %v58
    %63 = vst [vmem:[#allocation7 + $0x18] sm:$0xff] %v59
    // Predicated region
    $region18: #{tpu_custom_call.1} parent=1 // pred_check
      _
    $region19: #{tpu_custom_call.1} parent=1 // pred_check_branch
      %65 = sbr.rel (0) target = $region21
    $region20: #{tpu_custom_call.1} parent=1 // pred_region
      %67 = vsyncadd [#allocation4], 0
      %s69 = sshll.u32 [#allocation7], 4
      %s70 = int_to_ptr.vmem [resolvable:$true] %s69
      %s71 = sshll.u32 %s2, 4
      %s72 = int_to_ptr.hbm [resolvable:$true] %s71
      %74 = dma.vmem_to_hbm [thread:$0]  %s70, 512, %s72, [#allocation4]
    $region21: #{tpu_custom_call.1} parent=1 // pred_fallthru
      _
    // Predicated region
    $region22: #{tpu_custom_call.1} parent=1 // pred_check
      _
    $region23: #{tpu_custom_call.1} parent=1 // pred_check_branch
      %76 = sbr.rel (0) target = $region25
    $region24: #{tpu_custom_call.1} parent=1 // pred_region
      %78 = dma.done [#allocation4], 512
    $region25: #{tpu_custom_call.1} parent=1 // pred_fallthru
      _
    %79 = vsyncpa [#allocation3], 1
    %80 = vsyncpa [#allocation6], 1
    %81 = vsyncpa [#allocation4], 1

</llo_original>
